<compile_context>
chip_gen: v5e
topology: v5e:2x2
jax: 0.10.0
libtpu: 0.0.40
codegen_flags: <defaults>
</compile_context>

<pallas_src>
import numpy as np
import jax
import jax.numpy as jnp
from jax import lax
from jax.experimental import pallas as pl
from jax.experimental.pallas import tpu as pltpu


# ---------------------------------------------------------------------------
# Per-chip sizing
# ---------------------------------------------------------------------------

def _tpu_vmem_capacity():
    try:
        return int(pltpu.get_tpu_info().vmem_capacity_bytes)
    except Exception:
        return 64 * 1024 * 1024  # conservative (v7x-sized) fallback


_VMEM_CAP = _tpu_vmem_capacity()
_VMEM_LIMIT = min(96 * 1024 * 1024, max(32 * 1024 * 1024, _VMEM_CAP // 2))
_TILE_BUDGET = max(1 * 1024 * 1024, _VMEM_CAP // 16)


def _pick_row_tile(n_rows, bytes_per_out_row, budget=None):
    """Largest divisor of n_rows whose input tile fits in `budget` bytes."""
    budget = _TILE_BUDGET if budget is None else budget
    best = 1
    for d in range(1, n_rows + 1):
        if n_rows % d == 0 and d * bytes_per_out_row <= budget:
            best = d
    return best


# ---------------------------------------------------------------------------
# Host-side layout helpers (padding + column-pair folding; no data blow-up)
# ---------------------------------------------------------------------------

def _nhwc_pad(x, pad):
    h0, h1, w0, w1 = pad
    if h0 == h1 == w0 == w1 == 0:
        return x
    return jnp.pad(x, ((0, 0), (h0, h1), (w0, w1), (0, 0)))


def _fold_stride2_input(xp, K):
    """xp: padded NHWC (B, Hp, Wp, C).  Returns (xf, Ho, Wo, Wc) with
    xf: (B, Hp', Wc, 2*C) where column pairs (2w, 2w+1) are folded onto lanes.
    Extra zero rows/cols are appended only so every row tile has a valid 2-row
    halo block and the pair fold is exact; they never affect the math."""
    B, Hp, Wp, C = xp.shape
    Ho = (Hp - K) // 2 + 1
    Wo = (Wp - K) // 2 + 1
    qmax = (K - 1) // 2
    Wc = max(Wo + qmax, (Wp + 1) // 2)
    Hp_f = max(Hp, 2 * Ho + 2)
    xp = jnp.pad(xp, ((0, 0), (0, Hp_f - Hp), (0, 2 * Wc - Wp), (0, 0)))
    xf = xp.reshape(B, Hp_f, Wc, 2 * C)
    return xf, Ho, Wo, Wc


# ---------------------------------------------------------------------------
# Pallas kernels
# ---------------------------------------------------------------------------

def _make_conv3x3_s2_kernel(tHo, Wo):
    """Dense 3x3 stride-2 conv + bias on a pair-folded row tile.

    xm_ref: (1, 2*tHo, Wc, 2*Cin) bf16   input rows [2*t*tHo, 2*(t+1)*tHo)
    xh_ref: (1, 2,     Wc, 2*Cin) bf16   halo rows  [2*(t+1)*tHo, +2)
    w_ref : (3, 2, 2*Cin, Cout)  bf16    [dy, {taps(0,1), tap2+zero}, ...]
    b_ref : (1, Cout) f32
    o_ref : (1, tHo, Wo, Cout) f32
    xs_ref: VMEM scratch (2*tHo+2, Wc, 2*Cin) bf16
    """

    def kern(xm_ref, xh_ref, w_ref, b_ref, o_ref, xs_ref):
        Wc = xm_ref.shape[2]
        K2 = xm_ref.shape[3]          # 2*Cin
        Cout = o_ref.shape[3]
        # Assemble the contiguous (2*tHo+2)-row working tile in VMEM.
        xs_ref[0:2 * tHo] = xm_ref[0]
        xs_ref[2 * tHo:2 * tHo + 2] = xh_ref[0]
        xs = xs_ref[...].reshape(tHo + 1, 2, Wc, K2)
        x_ev = xs[:, 0]               # input rows 2r       (tHo+1, Wc, 2Cin)
        x_od = xs[:, 1]               # input rows 2r+1
        rows_by_dy = (x_ev[:tHo], x_od[:tHo], x_ev[1:])   # dy = 0, 1, 2

        acc = jnp.zeros((tHo * Wo, Cout), jnp.float32)
        for dy in range(3):
            xr = rows_by_dy[dy]                            # (tHo, Wc, 2Cin)
            # dx = 0,1: column pairs at offset 0;  dx = 2: pairs at offset 1
            pa = xr[:, 0:Wo, :].reshape(tHo * Wo, K2)
            pb = xr[:, 1:Wo + 1, :].reshape(tHo * Wo, K2)
            acc = acc + jnp.dot(pa, w_ref[dy, 0],
                                preferred_element_type=jnp.float32)
            acc = acc + jnp.dot(pb, w_ref[dy, 1],
                                preferred_element_type=jnp.float32)
        out = acc + b_ref[...]
        o_ref[0] = out.reshape(tHo, Wo, Cout).astype(o_ref.dtype)

    return kern


def _make_depthwise_s2_kernel(taps2d, tHo, Wo):
    """Per-channel KxK stride-2 tap reduction (avg-pool K=2, FIR-down K=4)."""
    K = taps2d.shape[0]
    taps = [[float(taps2d[i, j]) for j in range(K)] for i in range(K)]

    def kern(xm_ref, xh_ref, o_ref, xs_ref):
        C = o_ref.shape[3]
        Wc = xm_ref.shape[2]
        xs_ref[0:2 * tHo] = xm_ref[0]
        xs_ref[2 * tHo:2 * tHo + 2] = xh_ref[0]
        xs = xs_ref[...].astype(jnp.float32).reshape(tHo + 1, 2, Wc, 2 * C)
        # Split the folded column pairs back (two lane slices total).
        xs_px = (xs[..., 0:C], xs[..., C:2 * C])   # each (tHo+1, 2, Wc, C)
        acc = jnp.zeros((tHo, Wo, C), jnp.float32)
        for dy in range(K):
            qy, py = dy // 2, dy % 2
            for dx in range(K):
                qx, px = dx // 2, dx % 2
                rows = xs_px[px][:, py][qy:qy + tHo]        # (tHo, Wc, C)
                acc = acc + taps[dy][dx] * rows[:, qx:qx + Wo, :]
        o_ref[0] = acc.astype(o_ref.dtype)

    return kern


def _make_fir_s1_kernel(taps2d, tHf, Wf):
    """Per-channel KxK stride-1 FIR prefilter (f32 math, bf16 output)."""
    K = taps2d.shape[0]
    taps = [[float(taps2d[i, j]) for j in range(K)] for i in range(K)]

    def kern(*refs):
        xm_ref = refs[0]
        halo_refs = refs[1:K]          # K-1 single-row halo views
        o_ref = refs[K]
        xs_ref = refs[K + 1]
        C = o_ref.shape[3]
        xs_ref[0:tHf] = xm_ref[0]
        for k in range(K - 1):
            xs_ref[tHf + k:tHf + k + 1] = halo_refs[k][0]
        xs = xs_ref[...].astype(jnp.float32)
        acc = jnp.zeros((tHf, Wf, C), jnp.float32)
        for dy in range(K):
            rows = xs[dy:dy + tHf]
            for dx in range(K):
                acc = acc + taps[dy][dx] * rows[:, dx:dx + Wf, :]
        o_ref[0] = acc.astype(o_ref.dtype)

    return kern


# ---------------------------------------------------------------------------
# pallas_call wrappers
# ---------------------------------------------------------------------------

def conv3x3_stride2_pallas(x_nhwc, weight_oihw, bias, pad):
    """x: (B,H,W,Cin) NHWC; weight: (Cout,Cin,3,3) OIHW; bias: (Cout,)."""
    B, H, W, Cin = x_nhwc.shape
    Cout = int(weight_oihw.shape[0])
    xp = _nhwc_pad(x_nhwc, pad).astype(jnp.bfloat16)
    xf, Ho, Wo, Wc = _fold_stride2_input(xp, K=3)

    # Pack the 3x3 weights into the pair-folded matmul form:
    #   w_ref[dy, 0] = [W[dy,0]; W[dy,1]]     (acts on column pairs at offset 0)
    #   w_ref[dy, 1] = [W[dy,2]; 0      ]     (acts on column pairs at offset 1)
    w = jnp.transpose(weight_oihw.astype(jnp.float32), (2, 3, 1, 0))  # (3,3,Ci,Co)
    zero = jnp.zeros((Cin, Cout), jnp.float32)
    wA = jnp.stack([jnp.concatenate([w[dy, 0], w[dy, 1]], axis=0) for dy in range(3)])
    wB = jnp.stack([jnp.concatenate([w[dy, 2], zero], axis=0) for dy in range(3)])
    wcat = jnp.stack([wA, wB], axis=1).astype(jnp.bfloat16)   # (3, 2, 2*Cin, Cout)
    b2 = bias.reshape(1, Cout).astype(jnp.float32)

    tHo = _pick_row_tile(Ho, 2 * Wc * 2 * Cin * 2)
    nT = Ho // tHo
    kern = _make_conv3x3_s2_kernel(tHo, Wo)

    flops = 2 * B * Ho * Wo * 6 * (2 * Cin) * Cout
    bytes_accessed = int(xf.size) * 2 + int(wcat.size) * 2 + Cout * 4 \
        + B * Ho * Wo * Cout * 4

    out = pl.pallas_call(
        kern,
        out_shape=jax.ShapeDtypeStruct((B, Ho, Wo, Cout), jnp.float32),
        grid=(B, nT),
        in_specs=[
            pl.BlockSpec((1, 2 * tHo, Wc, 2 * Cin), lambda b, t: (b, t, 0, 0)),
            pl.BlockSpec((1, 2, Wc, 2 * Cin),
                         lambda b, t: (b, (t + 1) * tHo, 0, 0)),
            pl.BlockSpec((3, 2, 2 * Cin, Cout), lambda b, t: (0, 0, 0, 0)),
            pl.BlockSpec((1, Cout), lambda b, t: (0, 0)),
        ],
        out_specs=pl.BlockSpec((1, tHo, Wo, Cout), lambda b, t: (b, t, 0, 0)),
        scratch_shapes=[pltpu.VMEM((2 * tHo + 2, Wc, 2 * Cin), jnp.bfloat16)],
        compiler_params=pltpu.CompilerParams(
            dimension_semantics=("parallel", "parallel"),
            vmem_limit_bytes=_VMEM_LIMIT),
        cost_estimate=pl.CostEstimate(flops=flops, transcendentals=0,
                                      bytes_accessed=bytes_accessed),
    )(xf, xf, wcat, b2)
    return out


def depthwise_stride2_pallas(x_nhwc, taps2d, pad):
    """Per-channel KxK stride-2 filter (avg-pool / FIR downsample)."""
    taps2d = np.asarray(taps2d, np.float32)
    K = int(taps2d.shape[0])
    B, H, W, C = x_nhwc.shape
    xp = _nhwc_pad(x_nhwc, pad)
    xf, Ho, Wo, Wc = _fold_stride2_input(xp, K=K)
    itemsize = xf.dtype.itemsize

    tHo = _pick_row_tile(Ho, 2 * Wc * 2 * C * itemsize)
    kern = _make_depthwise_s2_kernel(taps2d, tHo, Wo)

    out = pl.pallas_call(
        kern,
        out_shape=jax.ShapeDtypeStruct((B, Ho, Wo, C), x_nhwc.dtype),
        grid=(B, Ho // tHo),
        in_specs=[
            pl.BlockSpec((1, 2 * tHo, Wc, 2 * C), lambda b, t: (b, t, 0, 0)),
            pl.BlockSpec((1, 2, Wc, 2 * C),
                         lambda b, t: (b, (t + 1) * tHo, 0, 0)),
        ],
        out_specs=pl.BlockSpec((1, tHo, Wo, C), lambda b, t: (b, t, 0, 0)),
        scratch_shapes=[pltpu.VMEM((2 * tHo + 2, Wc, 2 * C), xf.dtype)],
        compiler_params=pltpu.CompilerParams(
            dimension_semantics=("parallel", "parallel"),
            vmem_limit_bytes=_VMEM_LIMIT),
    )(xf, xf)
    return out


def fir_prefilter_stride1_pallas(x_nhwc, taps2d, pad, out_dtype=jnp.bfloat16):
    """Per-channel KxK stride-1 FIR prefilter; writes a bf16 intermediate."""
    taps2d = np.asarray(taps2d, np.float32)
    K = int(taps2d.shape[0])
    B, H, W, C = x_nhwc.shape
    xp = _nhwc_pad(x_nhwc, pad)
    Hp, Wp = xp.shape[1], xp.shape[2]
    Hf, Wf = Hp - K + 1, Wp - K + 1
    itemsize = xp.dtype.itemsize

    tHf = _pick_row_tile(Hf, Wp * C * itemsize)
    kern = _make_fir_s1_kernel(taps2d, tHf, Wf)

    halo_specs = [
        pl.BlockSpec((1, 1, Wp, C), (lambda b, t, k=k: (b, (t + 1) * tHf + k, 0, 0)))
        for k in range(K - 1)
    ]
    out = pl.pallas_call(
        kern,
        out_shape=jax.ShapeDtypeStruct((B, Hf, Wf, C), out_dtype),
        grid=(B, Hf // tHf),
        in_specs=[pl.BlockSpec((1, tHf, Wp, C), lambda b, t: (b, t, 0, 0))]
                 + halo_specs,
        out_specs=pl.BlockSpec((1, tHf, Wf, C), lambda b, t: (b, t, 0, 0)),
        scratch_shapes=[pltpu.VMEM((tHf + K - 1, Wp, C), xp.dtype)],
        compiler_params=pltpu.CompilerParams(
            dimension_semantics=("parallel", "parallel"),
            vmem_limit_bytes=_VMEM_LIMIT),
    )(*([xp] * K))
    return out


# ---------------------------------------------------------------------------
# Downsample module (JAX / Pallas)
# ---------------------------------------------------------------------------

class Downsample:
    def __init__(self, in_ch=None, out_ch=None, with_conv=False, fir=False,
                 fir_kernel=(1, 3, 3, 1), key=None):
        out_ch = out_ch if out_ch else in_ch
        self.fir = fir
        self.with_conv = with_conv
        self.out_ch = out_ch
        self.fir_kernel = fir_kernel
        if with_conv:
            key = key if key is not None else jax.random.PRNGKey(0)
            wk, bk = jax.random.split(key)
            fan_in = in_ch * 9
            # deterministic synthetic init (PyTorch uses default_init / zeros)
            self.weight = jax.random.normal(wk, (out_ch, in_ch, 3, 3),
                                            jnp.float32) / np.sqrt(fan_in)
            self.bias = 0.1 * jax.random.normal(bk, (out_ch,), jnp.float32)
        # _setup_kernel: outer product + normalize; upfirdn2d applies a flipped
        # (true-convolution) kernel -> flip here (no-op for the symmetric default).
        k1 = np.asarray(fir_kernel, np.float32)
        k2 = np.outer(k1, k1)
        k2 /= k2.sum()
        self._fir_taps = k2[::-1, ::-1].copy()

    def __call__(self, x):
        # x: NCHW
        xh = jnp.transpose(x, (0, 2, 3, 1))  # -> NHWC (channels on lanes)
        if not self.fir:
            if self.with_conv:
                # F.pad(x, (0,1,0,1)) == pad H bottom by 1, W right by 1
                y = conv3x3_stride2_pallas(xh, self.weight, self.bias,
                                           pad=(0, 1, 0, 1))
            else:
                avg = np.full((2, 2), 0.25, np.float32)
                y = depthwise_stride2_pallas(xh, avg, pad=(0, 0, 0, 0))
        else:
            ksz = self._fir_taps.shape[0]
            if not self.with_conv:
                p = ksz - 2
                pads = ((p + 1) // 2, p // 2, (p + 1) // 2, p // 2)
                y = depthwise_stride2_pallas(xh, self._fir_taps, pad=pads)
            else:
                # TODO(synk): fully fuse the FIR prefilter with the 3x3 stride-2
                # conv in one kernel (halo'd VMEM tile) to remove the remaining
                # bf16 intermediate HBM round-trip.
                p = (ksz - 2) + 2  # (k - factor) + (convW - 1)
                pads = ((p + 1) // 2, p // 2, (p + 1) // 2, p // 2)
                yf = fir_prefilter_stride1_pallas(xh, self._fir_taps, pad=pads,
                                                  out_dtype=jnp.bfloat16)
                y = conv3x3_stride2_pallas(yf, self.weight, self.bias,
                                           pad=(0, 0, 0, 0))
        return jnp.transpose(y, (0, 3, 1, 2))  # back to NCHW


# ---------------------------------------------------------------------------
# Pure-JAX reference (mirrors the kernels' bf16-operand / f32-accumulate math)
# ---------------------------------------------------------------------------

def _reference(x, mod):
    B, C, H, W = x.shape
    dn = ("NCHW", "OIHW", "NCHW")
    hi = lax.Precision.HIGHEST

    def bf(a):  # same operand rounding the Pallas conv path uses
        return a.astype(jnp.bfloat16).astype(jnp.float32)

    if not mod.fir:
        if mod.with_conv:
            xp = jnp.pad(bf(x), ((0, 0), (0, 0), (0, 1), (0, 1)))
            y = lax.conv_general_dilated(xp, bf(mod.weight), (2, 2), "VALID",
                                         dimension_numbers=dn, precision=hi)
            return y + mod.bias.reshape(1, -1, 1, 1)
        return x.reshape(B, C, H // 2, 2, W // 2, 2).mean(axis=(3, 5))

    wk = jnp.tile(jnp.asarray(mod._fir_taps, jnp.float32)[None, None],
                  (C, 1, 1, 1))
    ksz = mod._fir_taps.shape[0]
    if not mod.with_conv:
        p = ksz - 2
        pads = ((p + 1) // 2, p // 2)
        return lax.conv_general_dilated(x, wk, (2, 2), (pads, pads),
                                        dimension_numbers=dn,
                                        feature_group_count=C, precision=hi)
    p = (ksz - 2) + 2
    pads = ((p + 1) // 2, p // 2)
    xf = lax.conv_general_dilated(x, wk, (1, 1), (pads, pads),
                                  dimension_numbers=dn,
                                  feature_group_count=C, precision=hi)
    xf = bf(xf)  # kernel writes the FIR intermediate in bf16
    y = lax.conv_general_dilated(xf, bf(mod.weight), (2, 2), "VALID",
                                 dimension_numbers=dn, precision=hi)
    return y + mod.bias.reshape(1, -1, 1, 1)


# ---------------------------------------------------------------------------

if __name__ == "__main__":
    key = jax.random.PRNGKey(0)
    kx, k1, k2 = jax.random.split(key, 3)
    B, C, H, W = 2, 4, 16, 16
    x = jax.random.normal(kx, (B, C, H, W), jnp.float32)

    modules = [
        ("avgpool",  Downsample(in_ch=C, with_conv=False, fir=False)),
        ("conv_s2",  Downsample(in_ch=C, out_ch=8, with_conv=True, fir=False, key=k1)),
        ("fir_down", Downsample(in_ch=C, with_conv=False, fir=True)),
        ("fir_conv", Downsample(in_ch=C, out_ch=8, with_conv=True, fir=True, key=k2)),
    ]

    for name, mod in modules:
        out = jax.block_until_ready(mod(x))
        ref = jax.block_until_ready(_reference(x, mod))
        assert out.shape == ref.shape, (name, out.shape, ref.shape)
        assert jnp.allclose(out, ref, atol=2e-3, rtol=2e-3), f"mismatch in {name}"

    print("KERNEL_OK")
</pallas_src>

<mosaic_0001>
module attributes {stable_mosaic.version = 11 : i64} {
  func.func @kern(%arg0: i32, %arg1: i32, %arg2: memref<1x16x8x8xf32, #tpu.memory_space<vmem>>, %arg3: memref<1x2x8x8xf32, #tpu.memory_space<vmem>>, %arg4: memref<1x8x8x4xf32, #tpu.memory_space<vmem>>, %arg5: memref<18x8x8xf32, #tpu.memory_space<vmem>>) attributes {dimension_semantics = [#tpu.dimension_semantics<parallel>, #tpu.dimension_semantics<parallel>], iteration_bounds = array<i64: 2, 1>, scalar_prefetch = 0 : i64, scratch_operands = 1 : i64, tpu.core_type = #tpu.core_type<tc>, window_params = [{transform_indices = @transform_0, window_bounds = array<i64: 1, 16, 8, 8>}, {transform_indices = @transform_1, window_bounds = array<i64: 1, 2, 8, 8>}, {transform_indices = @transform_2, window_bounds = array<i64: 1, 8, 8, 4>}]} {
    %c0 = arith.constant 0 : index
    %c0_0 = arith.constant 0 : index
    %c0_1 = arith.constant 0 : index
    %c0_2 = arith.constant 0 : index
    %0 = vector.load %arg2[%c0, %c0_0, %c0_1, %c0_2] : memref<1x16x8x8xf32, #tpu.memory_space<vmem>>, vector<1x16x8x8xf32>
    %1 = vector.shape_cast %0 : vector<1x16x8x8xf32> to vector<16x8x8xf32>
    %c0_3 = arith.constant 0 : index
    %c0_4 = arith.constant 0 : index
    %c0_5 = arith.constant 0 : index
    %2 = vector.load %arg5[%c0_3, %c0_4, %c0_5] : memref<18x8x8xf32, #tpu.memory_space<vmem>>, vector<16x8x8xf32>
    tpu.vector_store %arg5[%c0_3, %c0_4, %c0_5], %1 {strides = array<i32>} : memref<18x8x8xf32, #tpu.memory_space<vmem>>, vector<16x8x8xf32>,
    %c0_6 = arith.constant 0 : index
    %c0_7 = arith.constant 0 : index
    %c0_8 = arith.constant 0 : index
    %c0_9 = arith.constant 0 : index
    %3 = vector.load %arg3[%c0_6, %c0_7, %c0_8, %c0_9] : memref<1x2x8x8xf32, #tpu.memory_space<vmem>>, vector<1x2x8x8xf32>
    %4 = vector.shape_cast %3 : vector<1x2x8x8xf32> to vector<2x8x8xf32>
    %c16 = arith.constant 16 : index
    %c0_10 = arith.constant 0 : index
    %c0_11 = arith.constant 0 : index
    %5 = vector.load %arg5[%c16, %c0_10, %c0_11] : memref<18x8x8xf32, #tpu.memory_space<vmem>>, vector<2x8x8xf32>
    tpu.vector_store %arg5[%c16, %c0_10, %c0_11], %4 {strides = array<i32>} : memref<18x8x8xf32, #tpu.memory_space<vmem>>, vector<2x8x8xf32>,
    %c0_12 = arith.constant 0 : index
    %c0_13 = arith.constant 0 : index
    %c0_14 = arith.constant 0 : index
    %6 = vector.load %arg5[%c0_12, %c0_13, %c0_14] : memref<18x8x8xf32, #tpu.memory_space<vmem>>, vector<18x8x8xf32>
    %7 = vector.shape_cast %6 : vector<18x8x8xf32> to vector<9x2x8x8xf32>
    %8 = vector.extract_strided_slice %7 {offsets = [0, 0, 0, 0], sizes = [9, 2, 8, 4], strides = [1, 1, 1, 1]} : vector<9x2x8x8xf32> to vector<9x2x8x4xf32>
    %9 = vector.extract_strided_slice %7 {offsets = [0, 0, 0, 4], sizes = [9, 2, 8, 4], strides = [1, 1, 1, 1]} : vector<9x2x8x8xf32> to vector<9x2x8x4xf32>
    %cst = arith.constant 0.000000e+00 : f32
    %10 = vector.broadcast %cst : f32 to vector<8x8x4xf32>
    %11 = vector.extract_strided_slice %8 {offsets = [0, 0, 0, 0], sizes = [9, 1, 8, 4], strides = [1, 1, 1, 1]} : vector<9x2x8x4xf32> to vector<9x1x8x4xf32>
    %12 = vector.shape_cast %11 : vector<9x1x8x4xf32> to vector<9x8x4xf32>
    %13 = vector.extract_strided_slice %12 {offsets = [0, 0, 0], sizes = [8, 8, 4], strides = [1, 1, 1]} : vector<9x8x4xf32> to vector<8x8x4xf32>
    %cst_15 = arith.constant 2.500000e-01 : f32
    %14 = vector.broadcast %cst_15 : f32 to vector<8x8x4xf32>
    %15 = arith.mulf %14, %13 : vector<8x8x4xf32>
    %16 = arith.addf %10, %15 : vector<8x8x4xf32>
    %17 = vector.extract_strided_slice %9 {offsets = [0, 0, 0, 0], sizes = [9, 1, 8, 4], strides = [1, 1, 1, 1]} : vector<9x2x8x4xf32> to vector<9x1x8x4xf32>
    %18 = vector.shape_cast %17 : vector<9x1x8x4xf32> to vector<9x8x4xf32>
    %19 = vector.extract_strided_slice %18 {offsets = [0, 0, 0], sizes = [8, 8, 4], strides = [1, 1, 1]} : vector<9x8x4xf32> to vector<8x8x4xf32>
    %cst_16 = arith.constant 2.500000e-01 : f32
    %20 = vector.broadcast %cst_16 : f32 to vector<8x8x4xf32>
    %21 = arith.mulf %20, %19 : vector<8x8x4xf32>
    %22 = arith.addf %16, %21 : vector<8x8x4xf32>
    %23 = vector.extract_strided_slice %8 {offsets = [0, 1, 0, 0], sizes = [9, 1, 8, 4], strides = [1, 1, 1, 1]} : vector<9x2x8x4xf32> to vector<9x1x8x4xf32>
    %24 = vector.shape_cast %23 : vector<9x1x8x4xf32> to vector<9x8x4xf32>
    %25 = vector.extract_strided_slice %24 {offsets = [0, 0, 0], sizes = [8, 8, 4], strides = [1, 1, 1]} : vector<9x8x4xf32> to vector<8x8x4xf32>
    %cst_17 = arith.constant 2.500000e-01 : f32
    %26 = vector.broadcast %cst_17 : f32 to vector<8x8x4xf32>
    %27 = arith.mulf %26, %25 : vector<8x8x4xf32>
    %28 = arith.addf %22, %27 : vector<8x8x4xf32>
    %29 = vector.extract_strided_slice %9 {offsets = [0, 1, 0, 0], sizes = [9, 1, 8, 4], strides = [1, 1, 1, 1]} : vector<9x2x8x4xf32> to vector<9x1x8x4xf32>
    %30 = vector.shape_cast %29 : vector<9x1x8x4xf32> to vector<9x8x4xf32>
    %31 = vector.extract_strided_slice %30 {offsets = [0, 0, 0], sizes = [8, 8, 4], strides = [1, 1, 1]} : vector<9x8x4xf32> to vector<8x8x4xf32>
    %cst_18 = arith.constant 2.500000e-01 : f32
    %32 = vector.broadcast %cst_18 : f32 to vector<8x8x4xf32>
    %33 = arith.mulf %32, %31 : vector<8x8x4xf32>
    %34 = arith.addf %28, %33 : vector<8x8x4xf32>
    %c0_19 = arith.constant 0 : index
    %c0_20 = arith.constant 0 : index
    %c0_21 = arith.constant 0 : index
    %c0_22 = arith.constant 0 : index
    %35 = vector.load %arg4[%c0_19, %c0_20, %c0_21, %c0_22] : memref<1x8x8x4xf32, #tpu.memory_space<vmem>>, vector<1x8x8x4xf32>
    %36 = vector.shape_cast %35 : vector<1x8x8x4xf32> to vector<8x8x4xf32>
    %37 = vector.shape_cast %34 : vector<8x8x4xf32> to vector<1x8x8x4xf32>
    tpu.vector_store %arg4[%c0_19, %c0_20, %c0_21, %c0_22], %37 {strides = array<i32>} : memref<1x8x8x4xf32, #tpu.memory_space<vmem>>, vector<1x8x8x4xf32>,
    return
  }
  func.func @transform_0(%arg0: i32, %arg1: i32) -> (i32, i32, i32, i32) {
    %c0_i32 = arith.constant 0 : i32
    %c0_i32_0 = arith.constant 0 : i32
    %c0_i32_1 = arith.constant 0 : i32
    return %arg0, %arg1, %c0_i32, %c0_i32_0 : i32, i32, i32, i32
  }
  func.func @transform_1(%arg0: i32, %arg1: i32) -> (i32, i32, i32, i32) {
    %c1_i32 = arith.constant 1 : i32
    %0 = arith.addi %arg1, %c1_i32 : i32
    %c8_i32 = arith.constant 8 : i32
    %1 = arith.muli %0, %c8_i32 : i32
    %c0_i32 = arith.constant 0 : i32
    %c0_i32_0 = arith.constant 0 : i32
    %c0_i32_1 = arith.constant 0 : i32
    return %arg0, %1, %c0_i32, %c0_i32_0 : i32, i32, i32, i32
  }
  func.func @transform_2(%arg0: i32, %arg1: i32) -> (i32, i32, i32, i32) {
    %c0_i32 = arith.constant 0 : i32
    %c0_i32_0 = arith.constant 0 : i32
    %c0_i32_1 = arith.constant 0 : i32
    return %arg0, %arg1, %c0_i32, %c0_i32_0 : i32, i32, i32, i32
  }
}

</mosaic_0001>

<llo_original>
// kernel: tpu_custom_call.1
$region0: #{tpu_custom_call.1}
  #allocation0 [shape = 'u32[]', space=smem, size = 0x4, offset = 0x4, fixed_abs, tag = 'smem constant byte address 0x4 - core index']
  #allocation1 [shape = 'u32[72,128]{1,0:T(1,128)}', space=vmem, size = 0x9000, scoped, tag = 'internal scratch']
  #allocation2 [shape = 'f32[18,8,8]{2,1,0:T(8,128)}', space=vmem, size = 0x12000, scoped, tag = 'scratch operand']
  %s0 = inlined_call_operand.vmem [shape: f32[2,18,8,8], index: 0, kind: input, shape index: {}]
  %s1 = inlined_call_operand.vmem [shape: f32[2,18,8,8], index: 1, kind: input, shape index: {}]
  %s2 = inlined_call_operand.vmem [shape: f32[2,8,8,4], index: 2, kind: output, shape index: {}]
  %s3 = sld [smem:[#allocation0]]
  $region41: #{tpu_custom_call.1} parent=0
    _
  %s5 = ssub.s32 1, %s3
  %s6 = scalar_select 0, %s5, %s3
  loop: start=0, step=1, limit=4
  $region2: #{tpu_custom_call.1} parent=0 // loop_pre_header
    _
  $region3: #{tpu_custom_call.1} parent=0 // loop_header
    %s8 = sphi 0, %s12
    %p9 = scmp.ge.s32.totalorder %s8, 4
    %s15 = sphi 0, %s27
    %s16 = sphi 0, %s23
    %s17 = sphi 0, %s15
    %s18 = sphi 0, %s16
    %s19 = sphi 0, %s17
    %s20 = sphi 0, %s18
    %s32 = sphi 0, %s34
    %s35 = sphi 0, %s32
    %s36 = sphi 0, %s35
    %s52 = sphi 0, %s36
    %s64 = sphi 0, %s66
    %s67 = sphi 0, %s64
    %s68 = sphi 0, %s67
    %s84 = sphi 0, %s68
    %s92 = sphi 0, %s94
    %s95 = sphi 0, %s92
    %s96 = sphi 0, %s95
    %s112 = sphi 0, %s96
  $region4: #{tpu_custom_call.1} parent=0 // loop_header_branch
    %11 = sbr.rel (%p9) target = $region8
  $region5: #{tpu_custom_call.1} parent=0 // loop_body
    %s13 = ssub.s32 %s8, 1
    %s14 = ssub.s32 %s8, 2
    %s21 = sadd.s32 1, %s16
    %p22 = scmp.ge.s32.totalorder %s21, 1
    %s23 = scalar_select %p22, 0, %s21
    %s24 = sadd.s32 1, %s15
    %s25 = scalar_select %p22, %s24, %s15
    %p26 = scmp.ge.s32.totalorder %s25, 2
    %s27 = scalar_select %p26, 0, %s25
    %s28 = ssub.s32 %s15, %s27
    %s29 = ssub.s32 %s16, %s23
    %s30 = sor.u32 %s28, %s29
    %p31 = scmp.eq.s32.totalorder %s30, 0
    %s33 = sadd.s32 %s32, 1
    %s34 = scalar_select %p31, %s32, %s33
    %p37 = pneg %p31
    %p38 = scmp.eq.s32.totalorder %s8, 1
    %p39 = por %p37, %p38
    %p40 = scmp.ne.s32.totalorder %s32, %s35
    %p41 = scmp.eq.s32.totalorder %s8, 0
    %p42 = por %p40, %p41
    %p43 = scmp.ne.s32.totalorder %s32, %s35
    %p44 = scmp.eq.s32.totalorder %s13, 1
    %p45 = por %p43, %p44
    %p46 = scmp.ne.s32.totalorder %s35, %s36
    %p47 = scmp.eq.s32.totalorder %s13, 0
    %p48 = por %p46, %p47
    %p49 = scmp.ne.s32.totalorder %s35, %s36
    %p50 = scmp.eq.s32.totalorder %s14, 1
    %p51 = por %p49, %p50
    %p53 = scmp.ne.s32.totalorder %s36, %s52
    %p54 = scmp.eq.s32.totalorder %s14, 0
    %p55 = por %p53, %p54
    %s56 = sadd.s32 %s16, 1
    %s57 = smul.u32 %s56, 8
    %s58 = sadd.s32 %s23, 1
    %s59 = smul.u32 %s58, 8
    %s60 = ssub.s32 %s15, %s27
    %s61 = ssub.s32 %s57, %s59
    %s62 = sor.u32 %s60, %s61
    %p63 = scmp.eq.s32.totalorder %s62, 0
    %s65 = sadd.s32 %s64, 1
    %s66 = scalar_select %p63, %s64, %s65
    %p69 = pneg %p63
    %p70 = scmp.eq.s32.totalorder %s8, 1
    %p71 = por %p69, %p70
    %p72 = scmp.ne.s32.totalorder %s64, %s67
    %p73 = scmp.eq.s32.totalorder %s8, 0
    %p74 = por %p72, %p73
    %p75 = scmp.ne.s32.totalorder %s64, %s67
    %p76 = scmp.eq.s32.totalorder %s13, 1
    %p77 = por %p75, %p76
    %p78 = scmp.ne.s32.totalorder %s67, %s68
    %p79 = scmp.eq.s32.totalorder %s13, 0
    %p80 = por %p78, %p79
    %p81 = scmp.ne.s32.totalorder %s67, %s68
    %p82 = scmp.eq.s32.totalorder %s14, 1
    %p83 = por %p81, %p82
    %p85 = scmp.ne.s32.totalorder %s68, %s84
    %p86 = scmp.eq.s32.totalorder %s14, 0
    %p87 = por %p85, %p86
    %s88 = ssub.s32 %s15, %s27
    %s89 = ssub.s32 %s16, %s23
    %s90 = sor.u32 %s88, %s89
    %p91 = scmp.eq.s32.totalorder %s90, 0
    %s93 = sadd.s32 %s92, 1
    %s94 = scalar_select %p91, %s92, %s93
    %p97 = pneg %p91
    %p98 = scmp.eq.s32.totalorder %s8, 1
    %p99 = por %p97, %p98
    %p100 = scmp.ne.s32.totalorder %s92, %s95
    %p101 = scmp.eq.s32.totalorder %s8, 0
    %p102 = por %p100, %p101
    %p103 = scmp.ne.s32.totalorder %s92, %s95
    %p104 = scmp.eq.s32.totalorder %s13, 1
    %p105 = por %p103, %p104
    %p106 = scmp.ne.s32.totalorder %s95, %s96
    %p107 = scmp.eq.s32.totalorder %s13, 0
    %p108 = por %p106, %p107
    %p109 = scmp.ne.s32.totalorder %s95, %s96
    %p110 = scmp.eq.s32.totalorder %s14, 1
    %p111 = por %p109, %p110
    %p113 = scmp.ne.s32.totalorder %s96, %s112
    %p114 = scmp.eq.s32.totalorder %s14, 0
    %p115 = por %p113, %p114
    %p116 = scmp.le.s32.totalorder 1, %s8
    %p117 = scmp.lt.s32.totalorder %s8, 3
    %p118 = pnand %p116, %p117
    %p119 = pneg %p118
    // Predicated region
    $region9: #{tpu_custom_call.1} parent=5 // pred_check
      _
    $region10: #{tpu_custom_call.1} parent=5 // pred_check_branch
      %121 = sbr.rel (%p118) target = $region12
    $region11: #{tpu_custom_call.1} parent=5 // pred_region
      %s122 = ssub.s32 %s8, 1
    $region12: #{tpu_custom_call.1} parent=5 // pred_fallthru
      _
    %p123 = scmp.lt.s32.totalorder %s8, 2
    // Predicated region
    $region13: #{tpu_custom_call.1} parent=5 // pred_check
      %p124 = pneg %p123
    $region14: #{tpu_custom_call.1} parent=5 // pred_check_branch
      %126 = sbr.rel (%p124) target = $region16
    $region15: #{tpu_custom_call.1} parent=5 // pred_region
      // Predicated region
      $region17: #{tpu_custom_call.1} parent=15 // pred_check
        %p127 = pneg %p42
      $region18: #{tpu_custom_call.1} parent=15 // pred_check_branch
        %129 = sbr.rel (%p127) target = $region20
      $region19: #{tpu_custom_call.1} parent=15 // pred_region
        %s130 = smul.u32 16, %s16
        %s131 = ssub.s32 18, %s130
        %p132 = scmp.lt.s32.totalorder %s131, 16
        %s133 = scalar_select %p132, %s131, 16
        %s134 = smul.u32 8, %s133
        %p135 = scmp.lt.s32.totalorder %s15, 1
        %s136 = scalar_select %p135, %s15, 1
        %p137 = scmp.lt.s32.totalorder %s130, 17
        %s138 = scalar_select %p137, %s130, 17
        %s139 = smul.addr %s136, 18
        %s140 = sadd.s32 %s138, %s139
        %s141 = smul.addr %s140, 8
        %s142 = scalar_lea.vmem %s0, %s141
        %s143 = smul.u32 16, %s16
        %s144 = ssub.s32 18, %s143
        %p145 = scmp.lt.s32.totalorder %s144, 16
        %s146 = scalar_select %p145, %s144, 16
        %s147 = smul.u32 8, %s146
      $region20: #{tpu_custom_call.1} parent=15 // pred_fallthru
        _
      // Predicated region
      $region21: #{tpu_custom_call.1} parent=15 // pred_check
        %p148 = pneg %p74
      $region22: #{tpu_custom_call.1} parent=15 // pred_check_branch
        %150 = sbr.rel (%p148) target = $region24
      $region23: #{tpu_custom_call.1} parent=15 // pred_region
        %s151 = sadd.s32 %s16, 1
        %s152 = smul.u32 %s151, 8
        %s153 = smul.u32 2, %s152
        %p154 = scmp.lt.s32.totalorder %s15, 1
        %s155 = scalar_select %p154, %s15, 1
        %p156 = scmp.lt.s32.totalorder %s153, 17
        %s157 = scalar_select %p156, %s153, 17
        %s158 = smul.addr %s155, 18
        %s159 = sadd.s32 %s157, %s158
        %s160 = smul.addr %s159, 8
        %s161 = scalar_lea.vmem %s1, %s160
        %s162 = sadd.s32 %s16, 1
        %s163 = smul.u32 %s162, 8
        %s164 = smul.u32 2, %s163
      $region24: #{tpu_custom_call.1} parent=15 // pred_fallthru
        _
    $region16: #{tpu_custom_call.1} parent=5 // pred_fallthru
      _
    %p165 = scmp.le.s32.totalorder 1, %s8
    %p166 = scmp.lt.s32.totalorder %s8, 3
    %p167 = pnand %p165, %p166
    %p168 = pneg %p167
    // Predicated region
    $region25: #{tpu_custom_call.1} parent=5 // pred_check
      _
    $region26: #{tpu_custom_call.1} parent=5 // pred_check_branch
      %170 = sbr.rel (%p167) target = $region28
    $region27: #{tpu_custom_call.1} parent=5 // pred_region
      %s171 = ssub.s32 %s8, 1
      %s172 = smul.u32 16, %s18
      %s173 = ssub.s32 18, %s172
      %p174 = scmp.lt.s32.totalorder %s173, 16
      %s175 = scalar_select %p174, %s173, 16
      %s176 = smul.u32 8, %s175
      %p177 = scmp.lt.s32.totalorder %s17, 1
      %s178 = scalar_select %p177, %s17, 1
      %p179 = scmp.lt.s32.totalorder %s172, 17
      %s180 = scalar_select %p179, %s172, 17
      %s181 = smul.addr %s178, 18
      %s182 = sadd.s32 %s180, %s181
      %s183 = smul.addr %s182, 8
      %s184 = scalar_lea.vmem %s0, %s183
      %p185 = pneg %p48
      %p186 = pneg %p45
      %s187 = sadd.s32 %s18, 1
      %s188 = smul.u32 %s187, 8
      %s189 = smul.u32 2, %s188
      %p190 = scmp.lt.s32.totalorder %s17, 1
      %s191 = scalar_select %p190, %s17, 1
      %p192 = scmp.lt.s32.totalorder %s189, 17
      %s193 = scalar_select %p192, %s189, 17
      %s194 = smul.addr %s191, 18
      %s195 = sadd.s32 %s193, %s194
      %s196 = smul.addr %s195, 8
      %s197 = scalar_lea.vmem %s1, %s196
      %p198 = pneg %p80
      %p199 = pneg %p77
      %p200 = pneg %p108
      %p201 = pneg %p105
      %s202 = smul.u32 8, %s18
      %p203 = scmp.lt.s32.totalorder %s17, 1
      %s204 = scalar_select %p203, %s17, 1
      %p205 = scmp.lt.s32.totalorder %s202, 7
      %s206 = scalar_select %p205, %s202, 7
      %s207 = smul.addr %s204, 8
      %s208 = sadd.s32 %s206, %s207
      %s209 = smul.addr %s208, 8
      %s210 = scalar_lea.vmem %s2, %s209
      %s211 = smul.u32 16, %s18
      %s212 = ssub.s32 18, %s211
      %p213 = scmp.lt.s32.totalorder %s212, 16
      %s214 = scalar_select %p213, %s212, 16
      %s215 = smul.u32 8, %s214
      %p216 = scmp.lt.s32.totalorder %s17, 1
      %s217 = scalar_select %p216, %s17, 1
      %p218 = scmp.lt.s32.totalorder %s211, 17
      %s219 = scalar_select %p218, %s211, 17
      %s220 = smul.addr %s217, 18
      %s221 = sadd.s32 %s219, %s220
      %s222 = smul.addr %s221, 8
      %s223 = scalar_lea.vmem %s0, %s222
      %s224 = smul.u32 16, %s18
      %s225 = ssub.s32 18, %s224
      %p226 = scmp.lt.s32.totalorder %s225, 16
      %s227 = scalar_select %p226, %s225, 16
      %s228 = smul.u32 8, %s227
      %s229 = sadd.s32 %s18, 1
      %s230 = smul.u32 %s229, 8
      %s231 = smul.u32 2, %s230
      %p232 = scmp.lt.s32.totalorder %s17, 1
      %s233 = scalar_select %p232, %s17, 1
      %p234 = scmp.lt.s32.totalorder %s231, 17
      %s235 = scalar_select %p234, %s231, 17
      %s236 = smul.addr %s233, 18
      %s237 = sadd.s32 %s235, %s236
      %s238 = smul.addr %s237, 8
      %s239 = scalar_lea.vmem %s1, %s238
      %s240 = sadd.s32 %s18, 1
      %s241 = smul.u32 %s240, 8
      %s242 = smul.u32 2, %s241
      %s243 = smul.u32 8, %s18
      %p244 = scmp.lt.s32.totalorder %s17, 1
      %s245 = scalar_select %p244, %s17, 1
      %p246 = scmp.lt.s32.totalorder %s243, 7
      %s247 = scalar_select %p246, %s243, 7
      %s248 = smul.addr %s245, 8
      %s249 = sadd.s32 %s247, %s248
      %s250 = smul.addr %s249, 8
      %s251 = scalar_lea.vmem %s2, %s250
      %s252 = smul.u32 8, %s18
      %v253 = vld [vmem:[%s223] sm:$0xff]
      %v254 = vld [vmem:[%s223 + $0x8] sm:$0xff]
      %v255 = vld [vmem:[%s223 + $0x10] sm:$0xff]
      %v256 = vld [vmem:[%s223 + $0x18] sm:$0xff]
      %v257 = vld [vmem:[%s223 + $0x20] sm:$0xff]
      %v258 = vld [vmem:[%s223 + $0x28] sm:$0xff]
      %v259 = vld [vmem:[%s223 + $0x30] sm:$0xff]
      %v260 = vld [vmem:[%s223 + $0x38] sm:$0xff]
      %v261 = vld [vmem:[%s223 + $0x40] sm:$0xff]
      %v262 = vld [vmem:[%s223 + $0x48] sm:$0xff]
      %v263 = vld [vmem:[%s223 + $0x50] sm:$0xff]
      %v264 = vld [vmem:[%s223 + $0x58] sm:$0xff]
      %v265 = vld [vmem:[%s223 + $0x60] sm:$0xff]
      %v266 = vld [vmem:[%s223 + $0x68] sm:$0xff]
      %v267 = vld [vmem:[%s223 + $0x70] sm:$0xff]
      %v268 = vld [vmem:[%s223 + $0x78] sm:$0xff]
      %vm269 = vcmask 64512
      %270 = vst.msk [vmem:[#allocation2] sm:$0xff] %vm269, %v253
      %271 = vst.msk [vmem:[#allocation2 + $0x8] sm:$0xff] %vm269, %v254
      %272 = vst.msk [vmem:[#allocation2 + $0x10] sm:$0xff] %vm269, %v255
      %273 = vst.msk [vmem:[#allocation2 + $0x18] sm:$0xff] %vm269, %v256
      %274 = vst.msk [vmem:[#allocation2 + $0x20] sm:$0xff] %vm269, %v257
      %275 = vst.msk [vmem:[#allocation2 + $0x28] sm:$0xff] %vm269, %v258
      %276 = vst.msk [vmem:[#allocation2 + $0x30] sm:$0xff] %vm269, %v259
      %277 = vst.msk [vmem:[#allocation2 + $0x38] sm:$0xff] %vm269, %v260
      %278 = vst.msk [vmem:[#allocation2 + $0x40] sm:$0xff] %vm269, %v261
      %279 = vst.msk [vmem:[#allocation2 + $0x48] sm:$0xff] %vm269, %v262
      %280 = vst.msk [vmem:[#allocation2 + $0x50] sm:$0xff] %vm269, %v263
      %281 = vst.msk [vmem:[#allocation2 + $0x58] sm:$0xff] %vm269, %v264
      %282 = vst.msk [vmem:[#allocation2 + $0x60] sm:$0xff] %vm269, %v265
      %283 = vst.msk [vmem:[#allocation2 + $0x68] sm:$0xff] %vm269, %v266
      %284 = vst.msk [vmem:[#allocation2 + $0x70] sm:$0xff] %vm269, %v267
      %285 = vst.msk [vmem:[#allocation2 + $0x78] sm:$0xff] %vm269, %v268
      %v286 = vld [vmem:[%s239] sm:$0xff]
      %v287 = vld [vmem:[%s239 + $0x8] sm:$0xff]
      %s288 = scalar_lea.vmem [#allocation2], 128
      %289 = vst.msk [vmem:[%s288] sm:$0xff] %vm269, %v286
      %290 = vst.msk [vmem:[%s288 + $0x8] sm:$0xff] %vm269, %v287
      %v291 = vld [vmem:[#allocation2] sm:$0xff]
      %v292 = vld [vmem:[#allocation2 + $0x8] sm:$0xff]
      %v293 = vld [vmem:[#allocation2 + $0x10] sm:$0xff]
      %v294 = vld [vmem:[#allocation2 + $0x18] sm:$0xff]
      %v295 = vld [vmem:[#allocation2 + $0x20] sm:$0xff]
      %v296 = vld [vmem:[#allocation2 + $0x28] sm:$0xff]
      %v297 = vld [vmem:[#allocation2 + $0x30] sm:$0xff]
      %v298 = vld [vmem:[#allocation2 + $0x38] sm:$0xff]
      %v299 = vld [vmem:[#allocation2 + $0x40] sm:$0xff]
      %v300 = vld [vmem:[#allocation2 + $0x48] sm:$0xff]
      %v301 = vld [vmem:[#allocation2 + $0x50] sm:$0xff]
      %v302 = vld [vmem:[#allocation2 + $0x58] sm:$0xff]
      %v303 = vld [vmem:[#allocation2 + $0x60] sm:$0xff]
      %v304 = vld [vmem:[#allocation2 + $0x68] sm:$0xff]
      %v305 = vld [vmem:[#allocation2 + $0x70] sm:$0xff]
      %v306 = vld [vmem:[#allocation2 + $0x78] sm:$0xff]
      %v307 = vmul.f32 %v291, 0.25
      %v308 = vmul.f32 %v293, 0.25
      %v309 = vmul.f32 %v295, 0.25
      %v310 = vmul.f32 %v297, 0.25
      %v311 = vmul.f32 %v299, 0.25
      %v312 = vmul.f32 %v301, 0.25
      %v313 = vmul.f32 %v303, 0.25
      %v314 = vmul.f32 %v305, 0.25
      %v315 = vadd.f32 %v307, 0.0
      %v316 = vadd.f32 %v308, 0.0
      %v317 = vadd.f32 %v309, 0.0
      %v318 = vadd.f32 %v310, 0.0
      %v319 = vadd.f32 %v311, 0.0
      %v320 = vadd.f32 %v312, 0.0
      %v321 = vadd.f32 %v313, 0.0
      %v322 = vadd.f32 %v314, 0.0
      %331 = vrot.lane.b32.xlu0 %v307, 124
      %v332 = vpop.permute.xlu0 %331
      %333 = vrot.lane.b32.xlu0 %v308, 124
      %v334 = vpop.permute.xlu0 %333
      %335 = vrot.lane.b32.xlu0 %v309, 124
      %v336 = vpop.permute.xlu0 %335
      %337 = vrot.lane.b32.xlu0 %v310, 124
      %v338 = vpop.permute.xlu0 %337
      %339 = vrot.lane.b32.xlu0 %v311, 124
      %v340 = vpop.permute.xlu0 %339
      %341 = vrot.lane.b32.xlu0 %v312, 124
      %v342 = vpop.permute.xlu0 %341
      %343 = vrot.lane.b32.xlu0 %v313, 124
      %v344 = vpop.permute.xlu0 %343
      %345 = vrot.lane.b32.xlu0 %v314, 124
      %v346 = vpop.permute.xlu0 %345
      %v355 = vadd.f32 %v315, %v332
      %v356 = vadd.f32 %v316, %v334
      %v357 = vadd.f32 %v317, %v336
      %v358 = vadd.f32 %v318, %v338
      %v359 = vadd.f32 %v319, %v340
      %v360 = vadd.f32 %v320, %v342
      %v361 = vadd.f32 %v321, %v344
      %v362 = vadd.f32 %v322, %v346
      %v363 = vmul.f32 %v292, 0.25
      %v364 = vmul.f32 %v294, 0.25
      %v365 = vmul.f32 %v296, 0.25
      %v366 = vmul.f32 %v298, 0.25
      %v367 = vmul.f32 %v300, 0.25
      %v368 = vmul.f32 %v302, 0.25
      %v369 = vmul.f32 %v304, 0.25
      %v370 = vmul.f32 %v306, 0.25
      %v371 = vadd.f32 %v355, %v363
      %v372 = vadd.f32 %v356, %v364
      %v373 = vadd.f32 %v357, %v365
      %v374 = vadd.f32 %v358, %v366
      %v375 = vadd.f32 %v359, %v367
      %v376 = vadd.f32 %v360, %v368
      %v377 = vadd.f32 %v361, %v369
      %v378 = vadd.f32 %v362, %v370
      %387 = vrot.lane.b32.xlu0 %v363, 124
      %v388 = vpop.permute.xlu0 %387
      %389 = vrot.lane.b32.xlu0 %v364, 124
      %v390 = vpop.permute.xlu0 %389
      %391 = vrot.lane.b32.xlu0 %v365, 124
      %v392 = vpop.permute.xlu0 %391
      %393 = vrot.lane.b32.xlu0 %v366, 124
      %v394 = vpop.permute.xlu0 %393
      %395 = vrot.lane.b32.xlu0 %v367, 124
      %v396 = vpop.permute.xlu0 %395
      %397 = vrot.lane.b32.xlu0 %v368, 124
      %v398 = vpop.permute.xlu0 %397
      %399 = vrot.lane.b32.xlu0 %v369, 124
      %v400 = vpop.permute.xlu0 %399
      %401 = vrot.lane.b32.xlu0 %v370, 124
      %v402 = vpop.permute.xlu0 %401
      %v411 = vadd.f32 %v371, %v388
      %v412 = vadd.f32 %v372, %v390
      %v413 = vadd.f32 %v373, %v392
      %v414 = vadd.f32 %v374, %v394
      %v415 = vadd.f32 %v375, %v396
      %v416 = vadd.f32 %v376, %v398
      %v417 = vadd.f32 %v377, %v400
      %v418 = vadd.f32 %v378, %v402
      %vm419 = vcmask 31744
      %420 = vst.msk [vmem:[%s251] sm:$0xff] %vm419, %v411
      %421 = vst.msk [vmem:[%s251 + $0x8] sm:$0xff] %vm419, %v412
      %422 = vst.msk [vmem:[%s251 + $0x10] sm:$0xff] %vm419, %v413
      %423 = vst.msk [vmem:[%s251 + $0x18] sm:$0xff] %vm419, %v414
      %424 = vst.msk [vmem:[%s251 + $0x20] sm:$0xff] %vm419, %v415
      %425 = vst.msk [vmem:[%s251 + $0x28] sm:$0xff] %vm419, %v416
      %426 = vst.msk [vmem:[%s251 + $0x30] sm:$0xff] %vm419, %v417
      %427 = vst.msk [vmem:[%s251 + $0x38] sm:$0xff] %vm419, %v418
      %s428 = smul.u32 8, %s18
      %p429 = scmp.lt.s32.totalorder %s17, 1
      %s430 = scalar_select %p429, %s17, 1
      %p431 = scmp.lt.s32.totalorder %s428, 7
      %s432 = scalar_select %p431, %s428, 7
      %s433 = smul.addr %s430, 8
      %s434 = sadd.s32 %s432, %s433
      %s435 = smul.addr %s434, 8
      %s436 = scalar_lea.vmem %s2, %s435
      // Predicated region
      $region29: #{tpu_custom_call.1} parent=27 // pred_check
        %p437 = pneg %p105
      $region30: #{tpu_custom_call.1} parent=27 // pred_check_branch
        %439 = sbr.rel (%p437) target = $region32
      $region31: #{tpu_custom_call.1} parent=27 // pred_region
        %s440 = smul.u32 8, %s18
      $region32: #{tpu_custom_call.1} parent=27 // pred_fallthru
        _
    $region28: #{tpu_custom_call.1} parent=5 // pred_fallthru
      _
    %p441 = scmp.le.s32.totalorder 2, %s8
    // Predicated region
    $region33: #{tpu_custom_call.1} parent=5 // pred_check
      %p442 = pneg %p441
    $region34: #{tpu_custom_call.1} parent=5 // pred_check_branch
      %444 = sbr.rel (%p442) target = $region36
    $region35: #{tpu_custom_call.1} parent=5 // pred_region
      %s445 = ssub.s32 %s8, 2
      // Predicated region
      $region37: #{tpu_custom_call.1} parent=35 // pred_check
        %p446 = pneg %p111
      $region38: #{tpu_custom_call.1} parent=35 // pred_check_branch
        %448 = sbr.rel (%p446) target = $region40
      $region39: #{tpu_custom_call.1} parent=35 // pred_region
        %s449 = smul.u32 8, %s20
        %p450 = scmp.lt.s32.totalorder %s19, 1
        %s451 = scalar_select %p450, %s19, 1
        %p452 = scmp.lt.s32.totalorder %s449, 7
        %s453 = scalar_select %p452, %s449, 7
        %s454 = smul.addr %s451, 8
        %s455 = sadd.s32 %s453, %s454
        %s456 = smul.addr %s455, 8
        %s457 = scalar_lea.vmem %s2, %s456
      $region40: #{tpu_custom_call.1} parent=35 // pred_fallthru
        _
    $region36: #{tpu_custom_call.1} parent=5 // pred_fallthru
      _
  $region6: #{tpu_custom_call.1} parent=0 // loop_footer
    %s12 = sadd.s32 1, %s8
  $region7: #{tpu_custom_call.1} parent=0 // loop_footer_branch
    %7 = sbr.rel target = $region3
  $region8: #{tpu_custom_call.1} parent=0 // loop_exit
    _

</llo_original>
